<compile_context>
chip_gen: v5e
topology: v5e:2x2
jax: 0.10.0
libtpu: 0.0.40
codegen_flags: <defaults>
</compile_context>

<pallas_src>
import jax
import jax.numpy as jnp
from jax.experimental import pallas as pl
from jax.experimental.pallas import tpu as pltpu

_LANES = 128               # vreg lane width
_ROW_ALIGN = 32            # uint8 packs (32, 128) per vreg
_SINGLE_BLOCK_ROWS = 256   # <=32 KiB input: one block, splitting is pure overhead
_TARGET_STEPS = 8          # >=8 grid steps -> DMA overlap + even v7x 2-TC split
_DEFAULT_TILE_ROWS = 8192  # 1 MiB in + 4 MiB out per block (safe on every gen)
_INV_255 = 1.0 / 255.0


def _byte_to_float_kernel(x_ref, o_ref):
    # Elementwise hot path: bytes -> f32, scale by 1/255 (VALU multiply).
    o_ref[...] = (x_ref[...].astype(jnp.float32) * jnp.float32(_INV_255)).astype(
        o_ref.dtype)


def _run_slab(slab, out_dtype, tile_rows):
    """Run the kernel on a lane-dense (rows, 128) slab."""
    rows = slab.shape[0]

    if rows <= _SINGLE_BLOCK_ROWS:
        block_rows = rows              # full-extent block: always layout-legal
        grid = (1,)
    else:
        per_step = pl.cdiv(rows, _TARGET_STEPS)
        per_step = pl.cdiv(per_step, _ROW_ALIGN) * _ROW_ALIGN
        block_rows = min(tile_rows, per_step)
        grid = (pl.cdiv(rows, block_rows),)

    index_map = lambda i: (i, 0)
    n_elems = rows * _LANES
    bytes_accessed = n_elems * (slab.dtype.itemsize + jnp.dtype(out_dtype).itemsize)

    def _call(in_spec):
        return pl.pallas_call(
            _byte_to_float_kernel,
            out_shape=jax.ShapeDtypeStruct((rows, _LANES), out_dtype),
            grid_spec=pltpu.PrefetchScalarGridSpec(
                num_scalar_prefetch=0,
                grid=grid,
                in_specs=[in_spec],
                out_specs=pl.BlockSpec((block_rows, _LANES), index_map),
            ),
            compiler_params=pltpu.CompilerParams(
                dimension_semantics=("parallel",),
            ),
            cost_estimate=pl.CostEstimate(
                flops=n_elems, transcendentals=0, bytes_accessed=bytes_accessed),
        )(slab)

    if grid[0] >= 3:
        # 3-deep input buffering: input is only 1/5 of the traffic, so an extra
        # inbound buffer is nearly free VMEM and keeps the input DMA queue full
        # while the 4x-larger output writebacks dominate the HBM channel.
        try:
            return _call(pl.BlockSpec((block_rows, _LANES), index_map,
                                      pipeline_mode=pl.Buffered(3)))
        except Exception:
            pass  # fall back to default 2-deep buffering on older builds
    return _call(pl.BlockSpec((block_rows, _LANES), index_map))


def pixel_byte_to_float(inp: jax.Array, *,
                        tile_rows: int = _DEFAULT_TILE_ROWS,
                        out_dtype=jnp.float32) -> jax.Array:
    """Equivalent of PixelByteToFloat.forward: inp.to(float) / 255.0.

    Accepts any shape / integer or float dtype.  `out_dtype=jnp.bfloat16` is an
    optional bandwidth-saving variant (the f32 writeback is 80% of HBM traffic);
    default float32 preserves parity with torch.
    """
    orig_shape = inp.shape
    total = 1
    for d in orig_shape:
        total *= d

    if total == 0:                       # degenerate empty tensor
        return jnp.zeros(orig_shape, out_dtype)

    tile_rows = max(_ROW_ALIGN, (tile_rows // _ROW_ALIGN) * _ROW_ALIGN)

    if total % _LANES == 0:
        # Common case (typical NCHW pixel tensors): free metadata reshape,
        # no padding, no extra wrapper HBM traffic.
        slab = jnp.reshape(inp, (total // _LANES, _LANES))
        out = _run_slab(slab, out_dtype, tile_rows)
        return jnp.reshape(out, orig_shape)

    # Ragged total: kernel on the 128-aligned bulk prefix, plain XLA on the
    # (<128-element) tail -- avoids the old full-array pad + output slice.
    flat = jnp.reshape(inp, (total,))
    bulk = (total // _LANES) * _LANES
    tail = (flat[bulk:].astype(jnp.float32) * jnp.float32(_INV_255)).astype(out_dtype)
    if bulk == 0:
        return jnp.reshape(tail, orig_shape)
    slab = jnp.reshape(flat[:bulk], (bulk // _LANES, _LANES))
    bulk_out = jnp.reshape(_run_slab(slab, out_dtype, tile_rows), (bulk,))
    return jnp.reshape(jnp.concatenate([bulk_out, tail]), orig_shape)


if __name__ == "__main__":
    key = jax.random.PRNGKey(0)
    k0, k1, k2 = jax.random.split(key, 3)

    # 1) Small NCHW pixel tensor (single-block path).
    x = jax.random.randint(k0, (2, 4, 16, 16), 0, 256, dtype=jnp.int32)
    x = x.astype(jnp.uint8)
    y = jax.block_until_ready(pixel_byte_to_float(x))
    ref = x.astype(jnp.float32) / 255.0
    assert y.shape == ref.shape and y.dtype == jnp.float32
    assert jnp.max(jnp.abs(y - ref)) < 1e-6

    # 2) Ragged total (not a multiple of 128): bulk-prefix kernel + XLA tail.
    x2 = jax.random.randint(k1, (2, 3, 5, 7), 0, 256, dtype=jnp.int32)
    x2 = x2.astype(jnp.uint8)
    y2 = jax.block_until_ready(pixel_byte_to_float(x2))
    ref2 = x2.astype(jnp.float32) / 255.0
    assert y2.shape == ref2.shape and jnp.max(jnp.abs(y2 - ref2)) < 1e-6

    # 3) Larger slab -> multi-step pipelined grid (8 steps, Buffered(3) input).
    x3 = jax.random.randint(k2, (4, 4, 64, 64), 0, 256, dtype=jnp.int32)
    x3 = x3.astype(jnp.uint8)
    y3 = jax.block_until_ready(pixel_byte_to_float(x3))
    ref3 = x3.astype(jnp.float32) / 255.0
    assert y3.shape == ref3.shape and jnp.max(jnp.abs(y3 - ref3)) < 1e-6

    print("KERNEL_OK")
</pallas_src>

<mosaic_0001>
module attributes {stable_mosaic.version = 11 : i64} {
  func.func @_byte_to_float_kernel(%arg0: i32, %arg1: memref<16x128xi8, #tpu.memory_space<vmem>>, %arg2: memref<16x128xf32, #tpu.memory_space<vmem>>) attributes {dimension_semantics = [#tpu.dimension_semantics<parallel>], iteration_bounds = array<i64: 1>, scalar_prefetch = 0 : i64, scratch_operands = 0 : i64, tpu.core_type = #tpu.core_type<tc>, window_params = [{transform_indices = @transform_0, window_bounds = array<i64: 16, 128>}, {transform_indices = @transform_1, window_bounds = array<i64: 16, 128>}]} {
    %c0 = arith.constant 0 : index
    %c0_0 = arith.constant 0 : index
    %0 = vector.load %arg1[%c0, %c0_0] : memref<16x128xi8, #tpu.memory_space<vmem>>, vector<16x128xi8>
    %1 = arith.uitofp %0 : vector<16x128xi8> to vector<16x128xf32>
    %cst = arith.constant 0.00392156886 : f32
    %2 = vector.broadcast %cst : f32 to vector<16x128xf32>
    %3 = arith.mulf %1, %2 : vector<16x128xf32>
    %c0_1 = arith.constant 0 : index
    %c0_2 = arith.constant 0 : index
    %4 = vector.load %arg2[%c0_1, %c0_2] : memref<16x128xf32, #tpu.memory_space<vmem>>, vector<16x128xf32>
    tpu.vector_store %arg2[%c0_1, %c0_2], %3 {strides = array<i32>} : memref<16x128xf32, #tpu.memory_space<vmem>>, vector<16x128xf32>,
    return
  }
  func.func @transform_0(%arg0: i32) -> (i32, i32) {
    %c0_i32 = arith.constant 0 : i32
    %c0_i32_0 = arith.constant 0 : i32
    return %arg0, %c0_i32 : i32, i32
  }
  func.func @transform_1(%arg0: i32) -> (i32, i32) {
    %c0_i32 = arith.constant 0 : i32
    %c0_i32_0 = arith.constant 0 : i32
    return %arg0, %c0_i32 : i32, i32
  }
}

</mosaic_0001>

<llo_original>
// kernel: tpu_custom_call.1
$region0: #{tpu_custom_call.1}
  #allocation0 [shape = 'u32[]', space=smem, size = 0x4, offset = 0x4, fixed_abs, tag = 'smem constant byte address 0x4 - core index']
  #allocation1 [shape = 'u32[72,128]{1,0:T(1,128)}', space=vmem, size = 0x9000, scoped, tag = 'internal scratch']
  %s0 = inlined_call_operand.hbm [shape: u8[16,128], index: 0, kind: input, shape index: {}]
  %s1 = inlined_call_operand.hbm [shape: f32[16,128], index: 1, kind: output, shape index: {}]
  %s2 = sld [smem:[#allocation0]]
  $region18: #{tpu_custom_call.1} parent=0
    _
  %s4 = ssub.s32 1, %s2
  %s5 = scalar_select 0, %s4, %s2
  $region1: #{tpu_custom_call.1} parent=0
    #allocation2 [shape = 'u8[2048]{0}', space=vmem, size = 0x800, scoped, tag = 'input window, operand 0, single buffered']
    #allocation3 [shape = 's32[1]{0}', space=sflag, size = 0x4, scoped, tag = 'scoped memory for tpu_custom_call.1']
    #allocation4 [shape = 's32[1]{0}', space=sflag, size = 0x4, scoped, tag = 'scoped memory for tpu_custom_call.1']
    #allocation5 [shape = 'u8[8192]{0}', space=vmem, size = 0x2000, scoped, tag = 'output window, operand 0, single buffered']
    %6 = vsyncpa [#allocation3], 0
    %7 = vsyncpa [#allocation4], 0
    // Predicated region
    $region2: #{tpu_custom_call.1} parent=1 // pred_check
      _
    $region3: #{tpu_custom_call.1} parent=1 // pred_check_branch
      %9 = sbr.rel (0) target = $region5
    $region4: #{tpu_custom_call.1} parent=1 // pred_region
      %11 = vsyncadd [#allocation3], 0
      %s12 = sshll.u32 %s0, 4
      %s13 = int_to_ptr.hbm [resolvable:$true] %s12
      %s14 = sshll.u32 [#allocation2], 4
      %s15 = int_to_ptr.vmem [resolvable:$true] %s14
      %20 = dma.hbm_to_vmem [thread:$0]  %s13, 64, %s15, [#allocation3], 32, 32, 2
    $region5: #{tpu_custom_call.1} parent=1 // pred_fallthru
      _
    // Predicated region
    $region6: #{tpu_custom_call.1} parent=1 // pred_check
      _
    $region7: #{tpu_custom_call.1} parent=1 // pred_check_branch
      %22 = sbr.rel (0) target = $region9
    $region8: #{tpu_custom_call.1} parent=1 // pred_region
      %24 = dma.done [#allocation3], 64
    $region9: #{tpu_custom_call.1} parent=1 // pred_fallthru
      _
    %v25 = vld [vmem:[#allocation2] sm:$0x3]
    %v26 = vld [vmem:[#allocation2 + $0x2] sm:$0x3]
    %v27 = vunpack.c.0.s8 %v25
    %v28 = vunpack.c.0.s8 %v26
    %v29 = vand.u32 %v27, 255
    %v30 = vand.u32 %v28, 255
    %v31 = vcvt.s32.f32 %v29
    %v32 = vcvt.s32.f32 %v30
    %v33 = vmul.f32 %v31, 0.003921569
    %v34 = vmul.f32 %v32, 0.003921569
    %35 = vst [vmem:[#allocation5] sm:$0xff] %v33
    %36 = vst [vmem:[#allocation5 + $0x8] sm:$0xff] %v34
    // Predicated region
    $region10: #{tpu_custom_call.1} parent=1 // pred_check
      _
    $region11: #{tpu_custom_call.1} parent=1 // pred_check_branch
      %38 = sbr.rel (0) target = $region13
    $region12: #{tpu_custom_call.1} parent=1 // pred_region
      %40 = vsyncadd [#allocation4], 0
      %s41 = sshll.u32 [#allocation5], 4
      %s42 = int_to_ptr.vmem [resolvable:$true] %s41
      %s43 = sshll.u32 %s1, 4
      %s44 = int_to_ptr.hbm [resolvable:$true] %s43
      %49 = dma.vmem_to_hbm [thread:$0]  %s42, 256, %s44, [#allocation4], 128, 128, 8
    $region13: #{tpu_custom_call.1} parent=1 // pred_fallthru
      _
    // Predicated region
    $region14: #{tpu_custom_call.1} parent=1 // pred_check
      _
    $region15: #{tpu_custom_call.1} parent=1 // pred_check_branch
      %51 = sbr.rel (0) target = $region17
    $region16: #{tpu_custom_call.1} parent=1 // pred_region
      %53 = dma.done [#allocation4], 256
    $region17: #{tpu_custom_call.1} parent=1 // pred_fallthru
      _
    %54 = vsyncpa [#allocation3], 1
    %55 = vsyncpa [#allocation4], 1

</llo_original>
